<compile_context>
chip_gen: v7x
topology: tpu7x:2x2x1
jax: 0.10.0
libtpu: 0.0.40
codegen_flags: <defaults>
</compile_context>

<pallas_src>
import jax
import jax.numpy as jnp
from jax.experimental import pallas as pl
from jax.experimental.pallas import tpu as pltpu  # noqa: F401  (TPU backend)

# ----------------------------- problem sizes -----------------------------
B = 2            # batch
C = 4            # image channels
H = W = 16       # image spatial
FEAT = 32        # backbone feature dim
J = 8            # number of joints
V = 128          # number of mesh vertices
ID_DIM = 8       # cfg.id_code_dim
ROOT = 0
PARENTS = [-1, 0, 1, 2, 0, 4, 5, 6]   # parent idx < child idx


# ----------------------------- Pallas kernels -----------------------------
def _encoder_kernel(xmean_ref, w1_ref, wcorr_ref, vpid_ref, euler_ref, xyz_ref):
    """Fused (folded) backbone+pose net and skin-refine corrective.

    xmean_ref : (B, C)     spatially pooled image (GAP commuted before 1x1 conv)
    w1_ref    : (C, J*3)   folded 0.1 * w_backbone @ w_pose
    wcorr_ref : (C, 3*V)   folded W1 @ w_skin_pose (columns coordinate-major)
    vpid_ref  : (1, 3*V)   rest-pose template + id corrective (coordinate-major)
    euler_ref : (B, J*3)   predicted joint euler angles (already scaled)
    xyz_ref   : (B, 3*V)   refined mesh coordinates, coordinate-major (lane-dense)
    """
    x = xmean_ref[...]
    euler_ref[...] = jnp.dot(x, w1_ref[...], preferred_element_type=jnp.float32)
    xyz_ref[...] = (
        jnp.dot(x, wcorr_ref[...], preferred_element_type=jnp.float32)
        + vpid_ref[...])                       # (1,3V) broadcast over B rows


def encoder(x_mean, w1, wcorr, vpid_flat):
    bsz = x_mean.shape[0]
    return pl.pallas_call(
        _encoder_kernel,
        out_shape=(
            jax.ShapeDtypeStruct((bsz, J * 3), jnp.float32),   # joint_euler flat
            jax.ShapeDtypeStruct((bsz, 3 * V), jnp.float32),   # refined mesh coords
        ),
    )(x_mean, w1, wcorr, vpid_flat)


def _lbs_kernel(xyz_ref, w_ref, t_ref, o_ref):
    """Linear blend skinning, single block, batch stacked on sublanes.

    xyz_ref : (B*3, V)   refined vertex coords, row b*3+c = coordinate c of batch b
    w_ref   : (J, V)     skinning weights (transposed once at setup)
    t_ref   : (B*12, J)  t[b*12 + 4r + k, j] = T[b, j, r, k], r < 3
    o_ref   : (B*3, V)
    """
    bsz = xyz_ref.shape[0] // 3
    # Blend per-joint 3x4 transforms per vertex with one lane-dense MXU dot:
    #   tb[b*12+4r+k, v] = sum_j T[b, j, r, k] * w[j, v]
    tb = jnp.dot(t_ref[...], w_ref[...], preferred_element_type=jnp.float32)
    xyz = xyz_ref[...]
    rows = []
    for b in range(bsz):
        for r in range(3):
            base = b * 12 + 4 * r
            row = tb[base + 3:base + 4, :]               # translation column (w = 1)
            for k in range(3):
                row = row + tb[base + k:base + k + 1, :] * xyz[b * 3 + k:b * 3 + k + 1, :]
            rows.append(row)
    o_ref[...] = jnp.concatenate(rows, axis=0)           # single dense (B*3, V) store


def lbs(xyz_stacked, skin_w_t, t_flat):
    return pl.pallas_call(
        _lbs_kernel,
        out_shape=jax.ShapeDtypeStruct(xyz_stacked.shape, jnp.float32),
    )(xyz_stacked, skin_w_t, t_flat)


# ----------------------------- JAX glue ops -----------------------------
def euler2mat_4x4(euler):
    """(B, J, 3) euler angles -> (B, J, 4, 4) homogeneous rotations (R = Rz@Ry@Rx)."""
    rx, ry, rz = euler[..., 0], euler[..., 1], euler[..., 2]
    cx, sx = jnp.cos(rx), jnp.sin(rx)
    cy, sy = jnp.cos(ry), jnp.sin(ry)
    cz, sz = jnp.cos(rz), jnp.sin(rz)
    z = jnp.zeros_like(rx)
    o = jnp.ones_like(rx)
    return jnp.stack([
        jnp.stack([cz * cy, cz * sy * sx - sz * cx, cz * sy * cx + sz * sx, z], -1),
        jnp.stack([sz * cy, sz * sy * sx + cz * cx, sz * sy * cx - cz * sx, z], -1),
        jnp.stack([-sy, cy * sx, cy * cx, z], -1),
        jnp.stack([z, z, z, o], -1),
    ], -2)


def forward_kinematics(parents, root, local_pose, root_global):
    """Unbatched FK for setup. local_pose: (J,4,4) -> global poses (J,4,4)."""
    nj = local_pose.shape[0]
    glob = [None] * nj
    glob[root] = root_global
    for j in range(nj):
        if j == root:
            continue
        glob[j] = glob[parents[j]] @ local_pose[j]
    return jnp.stack(glob)


def batched_fk(parents, root, local_pose, root_global):
    """Batched FK. local_pose: (B,J,4,4), root_global: (4,4) -> (B,J,4,4)."""
    bsz, nj = local_pose.shape[0], local_pose.shape[1]
    glob = [None] * nj
    glob[root] = jnp.broadcast_to(root_global, (bsz, 4, 4))
    for j in range(nj):
        if j == root:
            continue
        glob[j] = jnp.matmul(glob[parents[j]], local_pose[:, j])
    return jnp.stack(glob, axis=1)


# ----------------------------- one-time preprocessing -----------------------------
def prepare(params, mesh):
    """Fold weights, precompute id-code-dependent constants, hoist layout work."""
    # GAP commutes with the (linear) 1x1 conv -> fold backbone into pose net.
    w1 = 0.1 * (params['w_backbone'] @ params['w_pose'])                   # (C, J*3)
    # Permute skin-refine pose-corrective columns to coordinate-major (c*V + v),
    # then fold the (euler <- x_mean) chain into one (C, 3V) matrix.
    wsp_cm = params['w_skin_pose'].reshape(J * 3, V, 3).transpose(0, 2, 1).reshape(J * 3, 3 * V)
    wcorr = w1 @ wsp_cm                                                    # (C, 3*V)
    # id-code-dependent terms: parameters only -> computed once, never per call.
    skel_corr = (params['id_code'] @ params['w_skel']).reshape(J, 3)       # (J, 3)
    id_corr_cm = (params['id_code'] @ params['w_skin_id']).reshape(V, 3).T  # (3, V)
    vpid_flat = (mesh['v'].T + id_corr_cm).reshape(1, 3 * V)               # (1, 3*V)
    local_refined = mesh['local_pose'].at[:, :3, 3].add(skel_corr)         # (J, 4, 4)
    skin_w_t = mesh['skinning_weight'].T                                   # (J, V)
    return {
        'w1': w1,
        'wcorr': wcorr,
        'vpid_flat': vpid_flat,
        'local_refined': local_refined,
        'skin_w_t': skin_w_t,
        'global_pose_inv': mesh['global_pose_inv'],
    }


# ----------------------------- full forward (test mode) -----------------------------
def forward_test(img, consts):
    bsz = img.shape[0]

    # GAP before the 1x1 conv (exact: the conv is linear, no nonlinearity first).
    x_mean = jnp.mean(img, axis=(2, 3))                                    # (B, C)

    # --- Pallas call 1: folded encoder (euler angles + refined mesh coords) ---
    euler_flat, xyz_flat = encoder(x_mean, consts['w1'], consts['wcorr'],
                                   consts['vpid_flat'])
    joint_euler = euler_flat.reshape(bsz, J, 3)                            # scaled
    joint_rot_mat = euler2mat_4x4(joint_euler)                             # (B, J, 4, 4)

    # Batched forward kinematics (test mode: identity root global pose).
    local_i = jnp.matmul(consts['local_refined'][None], joint_rot_mat)     # (B, J, 4, 4)
    glob = batched_fk(PARENTS, ROOT, local_i, jnp.eye(4, dtype=jnp.float32))
    joint_out = glob[:, :, :3, 3]                                          # (B, J, 3)
    joint_trans_mat = jnp.matmul(glob, consts['global_pose_inv'][None])    # (B, J, 4, 4)

    # Layout for the single-block LBS kernel (tiny: B*J*12 floats).
    t_flat = jnp.transpose(joint_trans_mat[:, :, :3, :], (0, 2, 3, 1)).reshape(bsz * 12, J)
    xyz_stacked = xyz_flat.reshape(bsz * 3, V)                             # contiguous reshape

    # --- Pallas call 2: LBS, one block, batch stacked on sublanes ---
    mesh_out_t = lbs(xyz_stacked, consts['skin_w_t'], t_flat)              # (B*3, V)
    mesh_out_refined = jnp.transpose(mesh_out_t.reshape(bsz, 3, V), (0, 2, 1))

    return {'joint_out': joint_out, 'mesh_out_refined': mesh_out_refined}


# TODO(synk): train-mode branch (DepthmapLoss / JointLoss / PenetLoss / LaplacianLoss,
# differentiable renderer, rigid_transform_3D alignment) depends on external loss
# modules and a renderer; only the test/decode path is implemented here.
# TODO(synk): euler2mat + FK stay in JAX glue (data-dependent serial 4x4 chain);
# a further fusion into a single pallas_call is possible but not done here.


# ----------------------------- setup & run -----------------------------
def make_params_and_mesh(key):
    ks = jax.random.split(key, 10)
    params = {
        'id_code':     jax.random.normal(ks[0], (ID_DIM,), jnp.float32),
        'w_backbone':  jax.random.normal(ks[1], (C, FEAT), jnp.float32) * 0.1,
        'w_pose':      jax.random.normal(ks[2], (FEAT, J * 3), jnp.float32) * 0.1,
        'w_skel':      jax.random.normal(ks[3], (ID_DIM, J * 3), jnp.float32) * 0.01,
        'w_skin_pose': jax.random.normal(ks[4], (J * 3, V * 3), jnp.float32) * 0.01,
        'w_skin_id':   jax.random.normal(ks[5], (ID_DIM, V * 3), jnp.float32) * 0.01,
    }

    v = jax.random.normal(ks[6], (V, 3), jnp.float32) * 0.1
    skin_logits = jax.random.normal(ks[7], (V, J), jnp.float32)
    skinning_weight = jax.nn.softmax(skin_logits, axis=-1)

    # local_pose: identity rotation + small random translation per joint
    trans = jax.random.normal(ks[8], (J, 3), jnp.float32) * 0.1
    local_pose = jnp.tile(jnp.eye(4, dtype=jnp.float32)[None], (J, 1, 1))
    local_pose = local_pose.at[:, :3, 3].set(trans)

    global_pose = forward_kinematics(PARENTS, ROOT, local_pose, local_pose[ROOT])
    global_pose_inv = jnp.linalg.inv(global_pose)

    mesh = {
        'v': v,
        'skinning_weight': skinning_weight,
        'local_pose': local_pose,
        'global_pose': global_pose,
        'global_pose_inv': global_pose_inv,
    }
    return params, mesh


if __name__ == "__main__":
    key = jax.random.PRNGKey(0)
    k_img, k_rest = jax.random.split(key)
    img = jax.random.normal(k_img, (B, C, H, W), jnp.float32)   # NCHW like torch
    params, mesh = make_params_and_mesh(k_rest)

    consts = jax.tree_util.tree_map(jax.block_until_ready, prepare(params, mesh))

    fwd = jax.jit(forward_test)
    out = fwd(img, consts)
    jax.block_until_ready(out)

    assert out['joint_out'].shape == (B, J, 3)
    assert out['mesh_out_refined'].shape == (B, V, 3)
    print("KERNEL_OK")
</pallas_src>

<mosaic_0001>
module attributes {stable_mosaic.version = 11 : i64} {
  func.func @_encoder_kernel(%arg0: memref<2x4xf32, #tpu.memory_space<vmem>>, %arg1: memref<4x24xf32, #tpu.memory_space<vmem>>, %arg2: memref<4x384xf32, #tpu.memory_space<vmem>>, %arg3: memref<1x384xf32, #tpu.memory_space<vmem>>, %arg4: memref<2x24xf32, #tpu.memory_space<vmem>>, %arg5: memref<2x384xf32, #tpu.memory_space<vmem>>) attributes {dimension_semantics = [], scalar_prefetch = 0 : i64, scratch_operands = 0 : i64, tpu.core_type = #tpu.core_type<tc>} {
    %c0 = arith.constant 0 : index
    %c0_0 = arith.constant 0 : index
    %0 = vector.load %arg0[%c0, %c0_0] : memref<2x4xf32, #tpu.memory_space<vmem>>, vector<2x4xf32>
    %c0_1 = arith.constant 0 : index
    %c0_2 = arith.constant 0 : index
    %1 = vector.load %arg1[%c0_1, %c0_2] : memref<4x24xf32, #tpu.memory_space<vmem>>, vector<4x24xf32>
    %cst = arith.constant dense<0.000000e+00> : vector<2x24xf32>
    %2 = tpu.matmul %0, %1, %cst {dimension_numbers = #tpu.dot_dimension_numbers<[1], [0], [0], [1], [0, 0, 1, 1], [], []>} : vector<2x4xf32>, vector<4x24xf32>, vector<2x24xf32> -> vector<2x24xf32>
    %c0_3 = arith.constant 0 : index
    %c0_4 = arith.constant 0 : index
    %3 = vector.load %arg4[%c0_3, %c0_4] : memref<2x24xf32, #tpu.memory_space<vmem>>, vector<2x24xf32>
    tpu.vector_store %arg4[%c0_3, %c0_4], %2 {strides = array<i32>} : memref<2x24xf32, #tpu.memory_space<vmem>>, vector<2x24xf32>,
    %c0_5 = arith.constant 0 : index
    %c0_6 = arith.constant 0 : index
    %4 = vector.load %arg2[%c0_5, %c0_6] : memref<4x384xf32, #tpu.memory_space<vmem>>, vector<4x384xf32>
    %cst_7 = arith.constant dense<0.000000e+00> : vector<2x384xf32>
    %5 = tpu.matmul %0, %4, %cst_7 {dimension_numbers = #tpu.dot_dimension_numbers<[1], [0], [0], [1], [0, 0, 1, 1], [], []>} : vector<2x4xf32>, vector<4x384xf32>, vector<2x384xf32> -> vector<2x384xf32>
    %c0_8 = arith.constant 0 : index
    %c0_9 = arith.constant 0 : index
    %6 = vector.load %arg3[%c0_8, %c0_9] : memref<1x384xf32, #tpu.memory_space<vmem>>, vector<1x384xf32>
    %7 = vector.broadcast %6 : vector<1x384xf32> to vector<2x384xf32>
    %8 = arith.addf %5, %7 : vector<2x384xf32>
    %c0_10 = arith.constant 0 : index
    %c0_11 = arith.constant 0 : index
    %9 = vector.load %arg5[%c0_10, %c0_11] : memref<2x384xf32, #tpu.memory_space<vmem>>, vector<2x384xf32>
    tpu.vector_store %arg5[%c0_10, %c0_11], %8 {strides = array<i32>} : memref<2x384xf32, #tpu.memory_space<vmem>>, vector<2x384xf32>,
    return
  }
}

module attributes {stable_mosaic.version = 11 : i64} {
  func.func @_lbs_kernel(%arg0: memref<6x128xf32, #tpu.memory_space<vmem>>, %arg1: memref<8x128xf32, #tpu.memory_space<vmem>>, %arg2: memref<24x8xf32, #tpu.memory_space<vmem>>, %arg3: memref<6x128xf32, #tpu.memory_space<vmem>>) attributes {dimension_semantics = [], scalar_prefetch = 0 : i64, scratch_operands = 0 : i64, tpu.core_type = #tpu.core_type<tc>} {
    %c0 = arith.constant 0 : index
    %c0_0 = arith.constant 0 : index
    %0 = vector.load %arg2[%c0, %c0_0] : memref<24x8xf32, #tpu.memory_space<vmem>>, vector<24x8xf32>
    %c0_1 = arith.constant 0 : index
    %c0_2 = arith.constant 0 : index
    %1 = vector.load %arg1[%c0_1, %c0_2] : memref<8x128xf32, #tpu.memory_space<vmem>>, vector<8x128xf32>
    %cst = arith.constant dense<0.000000e+00> : vector<24x128xf32>
    %2 = tpu.matmul %0, %1, %cst {dimension_numbers = #tpu.dot_dimension_numbers<[1], [0], [0], [1], [0, 0, 1, 1], [], []>} : vector<24x8xf32>, vector<8x128xf32>, vector<24x128xf32> -> vector<24x128xf32>
    %c0_3 = arith.constant 0 : index
    %c0_4 = arith.constant 0 : index
    %3 = vector.load %arg0[%c0_3, %c0_4] : memref<6x128xf32, #tpu.memory_space<vmem>>, vector<6x128xf32>
    %4 = vector.extract_strided_slice %2 {offsets = [3, 0], sizes = [1, 128], strides = [1, 1]} : vector<24x128xf32> to vector<1x128xf32>
    %5 = vector.extract_strided_slice %2 {offsets = [0, 0], sizes = [1, 128], strides = [1, 1]} : vector<24x128xf32> to vector<1x128xf32>
    %6 = vector.extract_strided_slice %3 {offsets = [0, 0], sizes = [1, 128], strides = [1, 1]} : vector<6x128xf32> to vector<1x128xf32>
    %7 = arith.mulf %5, %6 : vector<1x128xf32>
    %8 = arith.addf %4, %7 : vector<1x128xf32>
    %9 = vector.extract_strided_slice %2 {offsets = [1, 0], sizes = [1, 128], strides = [1, 1]} : vector<24x128xf32> to vector<1x128xf32>
    %10 = vector.extract_strided_slice %3 {offsets = [1, 0], sizes = [1, 128], strides = [1, 1]} : vector<6x128xf32> to vector<1x128xf32>
    %11 = arith.mulf %9, %10 : vector<1x128xf32>
    %12 = arith.addf %8, %11 : vector<1x128xf32>
    %13 = vector.extract_strided_slice %2 {offsets = [2, 0], sizes = [1, 128], strides = [1, 1]} : vector<24x128xf32> to vector<1x128xf32>
    %14 = vector.extract_strided_slice %3 {offsets = [2, 0], sizes = [1, 128], strides = [1, 1]} : vector<6x128xf32> to vector<1x128xf32>
    %15 = arith.mulf %13, %14 : vector<1x128xf32>
    %16 = arith.addf %12, %15 : vector<1x128xf32>
    %17 = vector.extract_strided_slice %2 {offsets = [7, 0], sizes = [1, 128], strides = [1, 1]} : vector<24x128xf32> to vector<1x128xf32>
    %18 = vector.extract_strided_slice %2 {offsets = [4, 0], sizes = [1, 128], strides = [1, 1]} : vector<24x128xf32> to vector<1x128xf32>
    %19 = vector.extract_strided_slice %3 {offsets = [0, 0], sizes = [1, 128], strides = [1, 1]} : vector<6x128xf32> to vector<1x128xf32>
    %20 = arith.mulf %18, %19 : vector<1x128xf32>
    %21 = arith.addf %17, %20 : vector<1x128xf32>
    %22 = vector.extract_strided_slice %2 {offsets = [5, 0], sizes = [1, 128], strides = [1, 1]} : vector<24x128xf32> to vector<1x128xf32>
    %23 = vector.extract_strided_slice %3 {offsets = [1, 0], sizes = [1, 128], strides = [1, 1]} : vector<6x128xf32> to vector<1x128xf32>
    %24 = arith.mulf %22, %23 : vector<1x128xf32>
    %25 = arith.addf %21, %24 : vector<1x128xf32>
    %26 = vector.extract_strided_slice %2 {offsets = [6, 0], sizes = [1, 128], strides = [1, 1]} : vector<24x128xf32> to vector<1x128xf32>
    %27 = vector.extract_strided_slice %3 {offsets = [2, 0], sizes = [1, 128], strides = [1, 1]} : vector<6x128xf32> to vector<1x128xf32>
    %28 = arith.mulf %26, %27 : vector<1x128xf32>
    %29 = arith.addf %25, %28 : vector<1x128xf32>
    %30 = vector.extract_strided_slice %2 {offsets = [11, 0], sizes = [1, 128], strides = [1, 1]} : vector<24x128xf32> to vector<1x128xf32>
    %31 = vector.extract_strided_slice %2 {offsets = [8, 0], sizes = [1, 128], strides = [1, 1]} : vector<24x128xf32> to vector<1x128xf32>
    %32 = vector.extract_strided_slice %3 {offsets = [0, 0], sizes = [1, 128], strides = [1, 1]} : vector<6x128xf32> to vector<1x128xf32>
    %33 = arith.mulf %31, %32 : vector<1x128xf32>
    %34 = arith.addf %30, %33 : vector<1x128xf32>
    %35 = vector.extract_strided_slice %2 {offsets = [9, 0], sizes = [1, 128], strides = [1, 1]} : vector<24x128xf32> to vector<1x128xf32>
    %36 = vector.extract_strided_slice %3 {offsets = [1, 0], sizes = [1, 128], strides = [1, 1]} : vector<6x128xf32> to vector<1x128xf32>
    %37 = arith.mulf %35, %36 : vector<1x128xf32>
    %38 = arith.addf %34, %37 : vector<1x128xf32>
    %39 = vector.extract_strided_slice %2 {offsets = [10, 0], sizes = [1, 128], strides = [1, 1]} : vector<24x128xf32> to vector<1x128xf32>
    %40 = vector.extract_strided_slice %3 {offsets = [2, 0], sizes = [1, 128], strides = [1, 1]} : vector<6x128xf32> to vector<1x128xf32>
    %41 = arith.mulf %39, %40 : vector<1x128xf32>
    %42 = arith.addf %38, %41 : vector<1x128xf32>
    %43 = vector.extract_strided_slice %2 {offsets = [15, 0], sizes = [1, 128], strides = [1, 1]} : vector<24x128xf32> to vector<1x128xf32>
    %44 = vector.extract_strided_slice %2 {offsets = [12, 0], sizes = [1, 128], strides = [1, 1]} : vector<24x128xf32> to vector<1x128xf32>
    %45 = vector.extract_strided_slice %3 {offsets = [3, 0], sizes = [1, 128], strides = [1, 1]} : vector<6x128xf32> to vector<1x128xf32>
    %46 = arith.mulf %44, %45 : vector<1x128xf32>
    %47 = arith.addf %43, %46 : vector<1x128xf32>
    %48 = vector.extract_strided_slice %2 {offsets = [13, 0], sizes = [1, 128], strides = [1, 1]} : vector<24x128xf32> to vector<1x128xf32>
    %49 = vector.extract_strided_slice %3 {offsets = [4, 0], sizes = [1, 128], strides = [1, 1]} : vector<6x128xf32> to vector<1x128xf32>
    %50 = arith.mulf %48, %49 : vector<1x128xf32>
    %51 = arith.addf %47, %50 : vector<1x128xf32>
    %52 = vector.extract_strided_slice %2 {offsets = [14, 0], sizes = [1, 128], strides = [1, 1]} : vector<24x128xf32> to vector<1x128xf32>
    %53 = vector.extract_strided_slice %3 {offsets = [5, 0], sizes = [1, 128], strides = [1, 1]} : vector<6x128xf32> to vector<1x128xf32>
    %54 = arith.mulf %52, %53 : vector<1x128xf32>
    %55 = arith.addf %51, %54 : vector<1x128xf32>
    %56 = vector.extract_strided_slice %2 {offsets = [19, 0], sizes = [1, 128], strides = [1, 1]} : vector<24x128xf32> to vector<1x128xf32>
    %57 = vector.extract_strided_slice %2 {offsets = [16, 0], sizes = [1, 128], strides = [1, 1]} : vector<24x128xf32> to vector<1x128xf32>
    %58 = vector.extract_strided_slice %3 {offsets = [3, 0], sizes = [1, 128], strides = [1, 1]} : vector<6x128xf32> to vector<1x128xf32>
    %59 = arith.mulf %57, %58 : vector<1x128xf32>
    %60 = arith.addf %56, %59 : vector<1x128xf32>
    %61 = vector.extract_strided_slice %2 {offsets = [17, 0], sizes = [1, 128], strides = [1, 1]} : vector<24x128xf32> to vector<1x128xf32>
    %62 = vector.extract_strided_slice %3 {offsets = [4, 0], sizes = [1, 128], strides = [1, 1]} : vector<6x128xf32> to vector<1x128xf32>
    %63 = arith.mulf %61, %62 : vector<1x128xf32>
    %64 = arith.addf %60, %63 : vector<1x128xf32>
    %65 = vector.extract_strided_slice %2 {offsets = [18, 0], sizes = [1, 128], strides = [1, 1]} : vector<24x128xf32> to vector<1x128xf32>
    %66 = vector.extract_strided_slice %3 {offsets = [5, 0], sizes = [1, 128], strides = [1, 1]} : vector<6x128xf32> to vector<1x128xf32>
    %67 = arith.mulf %65, %66 : vector<1x128xf32>
    %68 = arith.addf %64, %67 : vector<1x128xf32>
    %69 = vector.extract_strided_slice %2 {offsets = [23, 0], sizes = [1, 128], strides = [1, 1]} : vector<24x128xf32> to vector<1x128xf32>
    %70 = vector.extract_strided_slice %2 {offsets = [20, 0], sizes = [1, 128], strides = [1, 1]} : vector<24x128xf32> to vector<1x128xf32>
    %71 = vector.extract_strided_slice %3 {offsets = [3, 0], sizes = [1, 128], strides = [1, 1]} : vector<6x128xf32> to vector<1x128xf32>
    %72 = arith.mulf %70, %71 : vector<1x128xf32>
    %73 = arith.addf %69, %72 : vector<1x128xf32>
    %74 = vector.extract_strided_slice %2 {offsets = [21, 0], sizes = [1, 128], strides = [1, 1]} : vector<24x128xf32> to vector<1x128xf32>
    %75 = vector.extract_strided_slice %3 {offsets = [4, 0], sizes = [1, 128], strides = [1, 1]} : vector<6x128xf32> to vector<1x128xf32>
    %76 = arith.mulf %74, %75 : vector<1x128xf32>
    %77 = arith.addf %73, %76 : vector<1x128xf32>
    %78 = vector.extract_strided_slice %2 {offsets = [22, 0], sizes = [1, 128], strides = [1, 1]} : vector<24x128xf32> to vector<1x128xf32>
    %79 = vector.extract_strided_slice %3 {offsets = [5, 0], sizes = [1, 128], strides = [1, 1]} : vector<6x128xf32> to vector<1x128xf32>
    %80 = arith.mulf %78, %79 : vector<1x128xf32>
    %81 = arith.addf %77, %80 : vector<1x128xf32>
    %82 = tpu.concatenate %16, %29, %42, %55, %68, %81 in 0 : vector<1x128xf32>, vector<1x128xf32>, vector<1x128xf32>, vector<1x128xf32>, vector<1x128xf32>, vector<1x128xf32> -> vector<6x128xf32>
    %c0_5 = arith.constant 0 : index
    %c0_6 = arith.constant 0 : index
    %83 = vector.load %arg3[%c0_5, %c0_6] : memref<6x128xf32, #tpu.memory_space<vmem>>, vector<6x128xf32>
    tpu.vector_store %arg3[%c0_5, %c0_6], %82 {strides = array<i32>} : memref<6x128xf32, #tpu.memory_space<vmem>>, vector<6x128xf32>,
    return
  }
}

</mosaic_0001>

<llo_original>
// kernel: forward_test.2
$region0: #{forward_test.2}
  #allocation0 [shape = 'u32[]', space=smem, size = 0x4, offset = 0x4, fixed_abs, tag = 'smem constant byte address 0x4 - core index']
  #allocation1 [shape = 'u32[144,128]{1,0:T(1,128)}', space=vmem, size = 0x12000, scoped, tag = 'internal scratch']
  %s0 = inlined_call_operand.vmem [shape: f32[2,4], index: 0, kind: input, shape index: {}]
  %s1 = inlined_call_operand.vmem [shape: f32[4,24], index: 1, kind: input, shape index: {}]
  %s2 = inlined_call_operand.vmem [shape: f32[4,384], index: 2, kind: input, shape index: {}]
  %s3 = inlined_call_operand.vmem [shape: f32[1,384], index: 3, kind: input, shape index: {}]
  %s4 = inlined_call_operand.vmem [shape: f32[2,24], index: 4, kind: output, shape index: {0}]
  %s5 = inlined_call_operand.vmem [shape: f32[2,384], index: 5, kind: output, shape index: {1}]
  %6 = xla_tuple %s4, %s5
  %s7 = sld [smem:[#allocation0]]
  $region34: #{forward_test.2} parent=0
    _
  %s9 = ssub.s32 1, %s7
  %s10 = scalar_select 0, %s9, %s7
  // Predicated region
  $region2: #{forward_test.2} parent=0 // pred_check
    _
  $region3: #{forward_test.2} parent=0 // pred_check_branch
    %12 = sbr.rel (0) target = $region5
  $region4: #{forward_test.2} parent=0 // pred_region
    _
  $region5: #{forward_test.2} parent=0 // pred_fallthru
    _
  // Predicated region
  $region6: #{forward_test.2} parent=0 // pred_check
    _
  $region7: #{forward_test.2} parent=0 // pred_check_branch
    %14 = sbr.rel (0) target = $region9
  $region8: #{forward_test.2} parent=0 // pred_region
    _
  $region9: #{forward_test.2} parent=0 // pred_fallthru
    _
  // Predicated region
  $region10: #{forward_test.2} parent=0 // pred_check
    _
  $region11: #{forward_test.2} parent=0 // pred_check_branch
    %16 = sbr.rel (0) target = $region13
  $region12: #{forward_test.2} parent=0 // pred_region
    _
  $region13: #{forward_test.2} parent=0 // pred_fallthru
    _
  // Predicated region
  $region14: #{forward_test.2} parent=0 // pred_check
    _
  $region15: #{forward_test.2} parent=0 // pred_check_branch
    %18 = sbr.rel (0) target = $region17
  $region16: #{forward_test.2} parent=0 // pred_region
    _
  $region17: #{forward_test.2} parent=0 // pred_fallthru
    _
  %v19 = vld [vmem:[%s0] sm:$0x3]
  %v20 = vld [vmem:[%s1] sm:$0xf]
  %vm21 = vcmask 31744
  %v23 = vsel %vm21, %v19, 0
  %vm25 = vcmask 1043456
  %v27 = vsel %vm25, %v20, 0
  %29 = vmatprep.subr.mxu0 0.0
  %30 = vmatpush1.msra.mxu0 %v27
  %31 = vmatprep.subr.mxu0 0.0
  %32 = vmatpush1.msra.mxu0 0.0
  %33 = vmatprep.subr.mxu0 0.0
  %34 = vmatpush1.msra.mxu0 0.0
  %35 = vmatprep.subr.mxu0 0.0
  %36 = vmatpush1.msra.mxu0 0.0
  %37 = vmatprep.subr.mxu0 0.0
  %38 = vmatpush1.msra.mxu0 0.0
  %39 = vmatprep.subr.mxu0 0.0
  %40 = vmatpush1.msra.mxu0 0.0
  %41 = vmatprep.subr.mxu0 0.0
  %42 = vmatpush1.msra.mxu0 0.0
  %43 = vmatprep.subr.mxu0 0.0
  %44 = vmatpush1.msra.mxu0 0.0
  %45 = vmatprep.subr.mxu0 0.0
  %46 = vmatpush1.msra.mxu0 0.0
  %47 = vmatprep.subr.mxu0 0.0
  %48 = vmatpush1.msra.mxu0 0.0
  %49 = vmatprep.subr.mxu0 0.0
  %50 = vmatpush1.msra.mxu0 0.0
  %51 = vmatprep.subr.mxu0 0.0
  %52 = vmatpush1.msra.mxu0 0.0
  %53 = vmatprep.subr.mxu0 0.0
  %54 = vmatpush1.msra.mxu0 0.0
  %55 = vmatprep.subr.mxu0 0.0
  %56 = vmatpush1.msra.mxu0 0.0
  %57 = vmatprep.subr.mxu0 0.0
  %58 = vmatpush1.msra.mxu0 0.0
  %59 = vmatprep.subr.mxu0 0.0
  %60 = vmatpush1.msra.mxu0 0.0
  %61 = vmatprep.subr.mxu0 0.0
  %62 = vmatpush1.msra.mxu0 0.0
  %63 = vmatprep.subr.mxu0 0.0
  %64 = vmatpush1.msra.mxu0 0.0
  %65 = vmatprep.subr.mxu0 0.0
  %66 = vmatpush1.msra.mxu0 0.0
  %67 = vmatprep.subr.mxu0 0.0
  %68 = vmatpush1.msra.mxu0 0.0
  %69 = vmatprep.subr.mxu0 0.0
  %70 = vmatpush1.msra.mxu0 0.0
  %71 = vmatprep.subr.mxu0 0.0
  %72 = vmatpush1.msra.mxu0 0.0
  %73 = vmatprep.subr.mxu0 0.0
  %74 = vmatpush1.msra.mxu0 0.0
  %75 = vmatprep.subr.mxu0 0.0
  %76 = vmatpush1.msra.mxu0 0.0
  %77 = vmatprep.subr.mxu0 0.0
  %78 = vmatpush1.msra.mxu0 0.0
  %79 = vmatprep.subr.mxu0 0.0
  %80 = vmatpush1.msra.mxu0 0.0
  %81 = vmatprep.subr.mxu0 0.0
  %82 = vmatpush1.msra.mxu0 0.0
  %83 = vmatprep.subr.mxu0 0.0
  %84 = vmatpush1.msra.mxu0 0.0
  %85 = vmatprep.subr.mxu0 0.0
  %86 = vmatpush1.msra.mxu0 0.0
  %87 = vmatprep.subr.mxu0 0.0
  %88 = vmatpush1.msra.mxu0 0.0
  %89 = vmatprep.subr.mxu0 0.0
  %90 = vmatpush1.msra.mxu0 0.0
  %91 = vmatprep.subr.mxu0 0.0
  %92 = vmatpush1.msra.mxu0 0.0
  %93 = vmatprep.mubr.f32.mxu0 0.0
  %94 = vmatmul.mubr.f32.gmra.mrb[0].mxu0 %v23
  %v95 = vpop.f32.mrb[0].mxu0
  %v96 = vadd.f32 0.0, %v95
  %v97 = vpop.f32.mrb[0].mxu0
  %98 = vdwg.mxu0
  %vm99 = vcmask 189440
  %100 = vst.msk [vmem:[%s4] sm:$0x3] %vm99, %v96
  %v101 = vld [vmem:[%s2] sm:$0xff]
  %v102 = vld [vmem:[%s2 + $0x8] sm:$0xf]
  %v103 = vld [vmem:[%s3] sm:$0x7]
  %v105 = vlaneseq
  %v106 = vshrl.u32 %v105, 7
  %v107 = vsub.s32 0, %v106
  %v108 = vrot.slane %v103, %v107
  %v109 = vlaneseq
  %v110 = vshrl.u32 %v109, 7
  %v111 = vsub.s32 1, %v110
  %v112 = vrot.slane %v103, %v111
  %v113 = vlaneseq
  %v114 = vshrl.u32 %v113, 7
  %v115 = vsub.s32 2, %v114
  %v116 = vrot.slane %v103, %v115
  %v122 = vcombine.high %v101, %v101
  %v123 = vsel %vm25, %v101, 0
  %v125 = vsel %vm25, %v122, 0
  %v127 = vsel %vm25, %v102, 0
  %129 = vmatprep.subr.mxu0 %v125
  %130 = vmatpush1.msra.mxu0 %v123
  %131 = vmatprep.subr.mxu0 0.0
  %132 = vmatpush1.msra.mxu0 0.0
  %133 = vmatprep.subr.mxu0 0.0
  %134 = vmatpush1.msra.mxu0 0.0
  %135 = vmatprep.subr.mxu0 0.0
  %136 = vmatpush1.msra.mxu0 0.0
  %137 = vmatprep.subr.mxu0 0.0
  %138 = vmatpush1.msra.mxu0 0.0
  %139 = vmatprep.subr.mxu0 0.0
  %140 = vmatpush1.msra.mxu0 0.0
  %141 = vmatprep.subr.mxu0 0.0
  %142 = vmatpush1.msra.mxu0 0.0
  %143 = vmatprep.subr.mxu0 0.0
  %144 = vmatpush1.msra.mxu0 0.0
  %145 = vmatprep.subr.mxu0 0.0
  %146 = vmatpush1.msra.mxu0 0.0
  %147 = vmatprep.subr.mxu0 0.0
  %148 = vmatpush1.msra.mxu0 0.0
  %149 = vmatprep.subr.mxu0 0.0
  %150 = vmatpush1.msra.mxu0 0.0
  %151 = vmatprep.subr.mxu0 0.0
  %152 = vmatpush1.msra.mxu0 0.0
  %153 = vmatprep.subr.mxu0 0.0
  %154 = vmatpush1.msra.mxu0 0.0
  %155 = vmatprep.subr.mxu0 0.0
  %156 = vmatpush1.msra.mxu0 0.0
  %157 = vmatprep.subr.mxu0 0.0
  %158 = vmatpush1.msra.mxu0 0.0
  %159 = vmatprep.subr.mxu0 0.0
  %160 = vmatpush1.msra.mxu0 0.0
  %161 = vmatprep.subr.mxu0 0.0
  %162 = vmatpush1.msra.mxu0 0.0
  %163 = vmatprep.subr.mxu0 0.0
  %164 = vmatpush1.msra.mxu0 0.0
  %165 = vmatprep.subr.mxu0 0.0
  %166 = vmatpush1.msra.mxu0 0.0
  %167 = vmatprep.subr.mxu0 0.0
  %168 = vmatpush1.msra.mxu0 0.0
  %169 = vmatprep.subr.mxu0 0.0
  %170 = vmatpush1.msra.mxu0 0.0
  %171 = vmatprep.subr.mxu0 0.0
  %172 = vmatpush1.msra.mxu0 0.0
  %173 = vmatprep.subr.mxu0 0.0
  %174 = vmatpush1.msra.mxu0 0.0
  %175 = vmatprep.subr.mxu0 0.0
  %176 = vmatpush1.msra.mxu0 0.0
  %177 = vmatprep.subr.mxu0 0.0
  %178 = vmatpush1.msra.mxu0 0.0
  %179 = vmatprep.subr.mxu0 0.0
  %180 = vmatpush1.msra.mxu0 0.0
  %181 = vmatprep.subr.mxu0 0.0
  %182 = vmatpush1.msra.mxu0 0.0
  %183 = vmatprep.subr.mxu0 0.0
  %184 = vmatpush1.msra.mxu0 0.0
  %185 = vmatprep.subr.mxu0 0.0
  %186 = vmatpush1.msra.mxu0 0.0
  %187 = vmatprep.subr.mxu0 0.0
  %188 = vmatpush1.msra.mxu0 0.0
  %189 = vmatprep.subr.mxu0 0.0
  %190 = vmatpush1.msra.mxu0 0.0
  %191 = vmatprep.subr.mxu0 0.0
  %192 = vmatpush1.msra.mxu0 0.0
  %193 = vmatprep.mubr.f32.mxu0 0.0
  %194 = vmatmul.mubr.f32.gmra.mrb[0].mxu0 %v23
  %v195 = vpop.f32.mrb[0].mxu0
  %v196 = vadd.f32 %v108, %v195
  %v197 = vpop.f32.mrb[0].mxu0
  %v198 = vadd.f32 %v112, %v197
  %199 = vdwg.mxu0
  %200 = vmatprep.subr.mxu0 0.0
  %201 = vmatpush1.msra.mxu0 %v127
  %202 = vmatprep.subr.mxu0 0.0
  %203 = vmatpush1.msra.mxu0 0.0
  %204 = vmatprep.subr.mxu0 0.0
  %205 = vmatpush1.msra.mxu0 0.0
  %206 = vmatprep.subr.mxu0 0.0
  %207 = vmatpush1.msra.mxu0 0.0
  %208 = vmatprep.subr.mxu0 0.0
  %209 = vmatpush1.msra.mxu0 0.0
  %210 = vmatprep.subr.mxu0 0.0
  %211 = vmatpush1.msra.mxu0 0.0
  %212 = vmatprep.subr.mxu0 0.0
  %213 = vmatpush1.msra.mxu0 0.0
  %214 = vmatprep.subr.mxu0 0.0
  %215 = vmatpush1.msra.mxu0 0.0
  %216 = vmatprep.subr.mxu0 0.0
  %217 = vmatpush1.msra.mxu0 0.0
  %218 = vmatprep.subr.mxu0 0.0
  %219 = vmatpush1.msra.mxu0 0.0
  %220 = vmatprep.subr.mxu0 0.0
  %221 = vmatpush1.msra.mxu0 0.0
  %222 = vmatprep.subr.mxu0 0.0
  %223 = vmatpush1.msra.mxu0 0.0
  %224 = vmatprep.subr.mxu0 0.0
  %225 = vmatpush1.msra.mxu0 0.0
  %226 = vmatprep.subr.mxu0 0.0
  %227 = vmatpush1.msra.mxu0 0.0
  %228 = vmatprep.subr.mxu0 0.0
  %229 = vmatpush1.msra.mxu0 0.0
  %230 = vmatprep.subr.mxu0 0.0
  %231 = vmatpush1.msra.mxu0 0.0
  %232 = vmatprep.subr.mxu0 0.0
  %233 = vmatpush1.msra.mxu0 0.0
  %234 = vmatprep.subr.mxu0 0.0
  %235 = vmatpush1.msra.mxu0 0.0
  %236 = vmatprep.subr.mxu0 0.0
  %237 = vmatpush1.msra.mxu0 0.0
  %238 = vmatprep.subr.mxu0 0.0
  %239 = vmatpush1.msra.mxu0 0.0
  %240 = vmatprep.subr.mxu0 0.0
  %241 = vmatpush1.msra.mxu0 0.0
  %242 = vmatprep.subr.mxu0 0.0
  %243 = vmatpush1.msra.mxu0 0.0
  %244 = vmatprep.subr.mxu0 0.0
  %245 = vmatpush1.msra.mxu0 0.0
  %246 = vmatprep.subr.mxu0 0.0
  %247 = vmatpush1.msra.mxu0 0.0
  %248 = vmatprep.subr.mxu0 0.0
  %249 = vmatpush1.msra.mxu0 0.0
  %250 = vmatprep.subr.mxu0 0.0
  %251 = vmatpush1.msra.mxu0 0.0
  %252 = vmatprep.subr.mxu0 0.0
  %253 = vmatpush1.msra.mxu0 0.0
  %254 = vmatprep.subr.mxu0 0.0
  %255 = vmatpush1.msra.mxu0 0.0
  %256 = vmatprep.subr.mxu0 0.0
  %257 = vmatpush1.msra.mxu0 0.0
  %258 = vmatprep.subr.mxu0 0.0
  %259 = vmatpush1.msra.mxu0 0.0
  %260 = vmatprep.subr.mxu0 0.0
  %261 = vmatpush1.msra.mxu0 0.0
  %262 = vmatprep.subr.mxu0 0.0
  %263 = vmatpush1.msra.mxu0 0.0
  %264 = vmatprep.mubr.f32.mxu0 0.0
  %265 = vmatmul.mubr.f32.gmra.mrb[0].mxu0 %v23
  %v266 = vpop.f32.mrb[0].mxu0
  %v267 = vadd.f32 %v116, %v266
  %v268 = vpop.f32.mrb[0].mxu0
  %269 = vdwg.mxu0
  %v273 = vcombine.low %v196, %v198
  %v275 = vunpack.c.l.s4 1983009808
  %v276 = vunpack.c.0.s8 %v275
  %v277 = vlaneseq
  %v278 = vshrl.u32 %v277, 7
  %v279 = vsub.s32 %v276, %v278
  %v280 = vrot.slane %v273, %v279
  %v282 = vunpack.c.l.s4 1983009808
  %v283 = vunpack.c.0.s8 %v282
  %v284 = vlaneseq
  %v285 = vshrl.u32 %v284, 7
  %v286 = vsub.s32 %v283, %v285
  %v287 = vrot.slane %v267, %v286
  %v288 = vcombine.low %v280, %v287
  %290 = vst [vmem:[%s5] sm:$0x3f] %v288
  // Predicated region
  $region18: #{forward_test.2} parent=0 // pred_check
    _
  $region19: #{forward_test.2} parent=0 // pred_check_branch
    %292 = sbr.rel (0) target = $region21
  $region20: #{forward_test.2} parent=0 // pred_region
    _
  $region21: #{forward_test.2} parent=0 // pred_fallthru
    _
  // Predicated region
  $region22: #{forward_test.2} parent=0 // pred_check
    _
  $region23: #{forward_test.2} parent=0 // pred_check_branch
    %294 = sbr.rel (0) target = $region25
  $region24: #{forward_test.2} parent=0 // pred_region
    _
  $region25: #{forward_test.2} parent=0 // pred_fallthru
    _
  // Predicated region
  $region26: #{forward_test.2} parent=0 // pred_check
    _
  $region27: #{forward_test.2} parent=0 // pred_check_branch
    %296 = sbr.rel (0) target = $region29
  $region28: #{forward_test.2} parent=0 // pred_region
    _
  $region29: #{forward_test.2} parent=0 // pred_fallthru
    _
  // Predicated region
  $region30: #{forward_test.2} parent=0 // pred_check
    _
  $region31: #{forward_test.2} parent=0 // pred_check_branch
    %298 = sbr.rel (0) target = $region33
  $region32: #{forward_test.2} parent=0 // pred_region
    _
  $region33: #{forward_test.2} parent=0 // pred_fallthru
    _

// kernel: forward_test.3
$region0: #{forward_test.3}
  #allocation0 [shape = 'u32[]', space=smem, size = 0x4, offset = 0x4, fixed_abs, tag = 'smem constant byte address 0x4 - core index']
  #allocation1 [shape = 'u32[144,128]{1,0:T(1,128)}', space=vmem, size = 0x12000, scoped, tag = 'internal scratch']
  %s0 = inlined_call_operand.vmem [shape: f32[6,128], index: 0, kind: input, shape index: {}]
  %s1 = inlined_call_operand.vmem [shape: f32[8,128], index: 1, kind: input, shape index: {}]
  %s2 = inlined_call_operand.vmem [shape: f32[24,8], index: 2, kind: input, shape index: {}]
  %s3 = inlined_call_operand.vmem [shape: f32[6,128], index: 3, kind: output, shape index: {}]
  %s4 = sld [smem:[#allocation0]]
  $region22: #{forward_test.3} parent=0
    _
  %s6 = ssub.s32 1, %s4
  %s7 = scalar_select 0, %s6, %s4
  // Predicated region
  $region2: #{forward_test.3} parent=0 // pred_check
    _
  $region3: #{forward_test.3} parent=0 // pred_check_branch
    %9 = sbr.rel (0) target = $region5
  $region4: #{forward_test.3} parent=0 // pred_region
    _
  $region5: #{forward_test.3} parent=0 // pred_fallthru
    _
  // Predicated region
  $region6: #{forward_test.3} parent=0 // pred_check
    _
  $region7: #{forward_test.3} parent=0 // pred_check_branch
    %11 = sbr.rel (0) target = $region9
  $region8: #{forward_test.3} parent=0 // pred_region
    _
  $region9: #{forward_test.3} parent=0 // pred_fallthru
    _
  // Predicated region
  $region10: #{forward_test.3} parent=0 // pred_check
    _
  $region11: #{forward_test.3} parent=0 // pred_check_branch
    %13 = sbr.rel (0) target = $region13
  $region12: #{forward_test.3} parent=0 // pred_region
    _
  $region13: #{forward_test.3} parent=0 // pred_fallthru
    _
  %v14 = vld [vmem:[%s2] sm:$0xff]
  %v15 = vld [vmem:[%s2 + $0x8] sm:$0xff]
  %v16 = vld [vmem:[%s2 + $0x10] sm:$0xff]
  %v17 = vld [vmem:[%s1] sm:$0xff]
  %vm18 = vcmask 64512
  %v20 = vsel %vm18, %v14, 0
  %v23 = vsel %vm18, %v15, 0
  %v26 = vsel %vm18, %v16, 0
  %28 = vmatprep.subr.mxu0 0.0
  %29 = vmatpush1.msra.mxu0 %v17
  %30 = vmatprep.subr.mxu0 0.0
  %31 = vmatpush1.msra.mxu0 0.0
  %32 = vmatprep.subr.mxu0 0.0
  %33 = vmatpush1.msra.mxu0 0.0
  %34 = vmatprep.subr.mxu0 0.0
  %35 = vmatpush1.msra.mxu0 0.0
  %36 = vmatprep.subr.mxu0 0.0
  %37 = vmatpush1.msra.mxu0 0.0
  %38 = vmatprep.subr.mxu0 0.0
  %39 = vmatpush1.msra.mxu0 0.0
  %40 = vmatprep.subr.mxu0 0.0
  %41 = vmatpush1.msra.mxu0 0.0
  %42 = vmatprep.subr.mxu0 0.0
  %43 = vmatpush1.msra.mxu0 0.0
  %44 = vmatprep.subr.mxu0 0.0
  %45 = vmatpush1.msra.mxu0 0.0
  %46 = vmatprep.subr.mxu0 0.0
  %47 = vmatpush1.msra.mxu0 0.0
  %48 = vmatprep.subr.mxu0 0.0
  %49 = vmatpush1.msra.mxu0 0.0
  %50 = vmatprep.subr.mxu0 0.0
  %51 = vmatpush1.msra.mxu0 0.0
  %52 = vmatprep.subr.mxu0 0.0
  %53 = vmatpush1.msra.mxu0 0.0
  %54 = vmatprep.subr.mxu0 0.0
  %55 = vmatpush1.msra.mxu0 0.0
  %56 = vmatprep.subr.mxu0 0.0
  %57 = vmatpush1.msra.mxu0 0.0
  %58 = vmatprep.subr.mxu0 0.0
  %59 = vmatpush1.msra.mxu0 0.0
  %60 = vmatprep.subr.mxu0 0.0
  %61 = vmatpush1.msra.mxu0 0.0
  %62 = vmatprep.subr.mxu0 0.0
  %63 = vmatpush1.msra.mxu0 0.0
  %64 = vmatprep.subr.mxu0 0.0
  %65 = vmatpush1.msra.mxu0 0.0
  %66 = vmatprep.subr.mxu0 0.0
  %67 = vmatpush1.msra.mxu0 0.0
  %68 = vmatprep.subr.mxu0 0.0
  %69 = vmatpush1.msra.mxu0 0.0
  %70 = vmatprep.subr.mxu0 0.0
  %71 = vmatpush1.msra.mxu0 0.0
  %72 = vmatprep.subr.mxu0 0.0
  %73 = vmatpush1.msra.mxu0 0.0
  %74 = vmatprep.subr.mxu0 0.0
  %75 = vmatpush1.msra.mxu0 0.0
  %76 = vmatprep.subr.mxu0 0.0
  %77 = vmatpush1.msra.mxu0 0.0
  %78 = vmatprep.subr.mxu0 0.0
  %79 = vmatpush1.msra.mxu0 0.0
  %80 = vmatprep.subr.mxu0 0.0
  %81 = vmatpush1.msra.mxu0 0.0
  %82 = vmatprep.subr.mxu0 0.0
  %83 = vmatpush1.msra.mxu0 0.0
  %84 = vmatprep.subr.mxu0 0.0
  %85 = vmatpush1.msra.mxu0 0.0
  %86 = vmatprep.subr.mxu0 0.0
  %87 = vmatpush1.msra.mxu0 0.0
  %88 = vmatprep.subr.mxu0 0.0
  %89 = vmatpush1.msra.mxu0 0.0
  %90 = vmatprep.subr.mxu0 0.0
  %91 = vmatpush1.msra.mxu0 0.0
  %92 = vmatprep.mubr.f32.mxu0 0.0
  %93 = vmatmul.mubr.f32.gmra.mrb[0].mxu0 %v20
  %v94 = vpop.f32.mrb[0].mxu0
  %v95 = vadd.f32 0.0, %v94
  %v96 = vpop.f32.mrb[0].mxu0
  %97 = vmatprep.mubr.f32.mxu0 0.0
  %98 = vmatmul.mubr.f32.gmra.mrb[0].mxu0 %v23
  %v99 = vpop.f32.mrb[0].mxu0
  %v100 = vadd.f32 0.0, %v99
  %v101 = vpop.f32.mrb[0].mxu0
  %102 = vmatprep.mubr.f32.mxu0 0.0
  %103 = vmatmul.mubr.f32.gmra.mrb[0].mxu0 %v26
  %v104 = vpop.f32.mrb[0].mxu0
  %v105 = vadd.f32 0.0, %v104
  %v106 = vpop.f32.mrb[0].mxu0
  %107 = vdwg.mxu0
  %v108 = vld [vmem:[%s0] sm:$0x3f]
  %v109 = vmul.f32 %v95, %v108
  %v111 = vrot.slane %v109, 5
  %v113 = vadd.f32 %v95, %v111
  %v114 = vrot.slane %v109, 6
  %v116 = vadd.f32 %v113, %v114
  %v117 = vrot.slane %v109, 7
  %v119 = vadd.f32 %v116, %v117
  %v121 = vrot.slane %v108, 4
  %v123 = vmul.f32 %v95, %v121
  %v125 = vrot.slane %v123, 5
  %v127 = vadd.f32 %v95, %v125
  %v128 = vrot.slane %v123, 6
  %v130 = vadd.f32 %v127, %v128
  %v131 = vrot.slane %v123, 7
  %v133 = vadd.f32 %v130, %v131
  %v134 = vmul.f32 %v100, %v108
  %v136 = vrot.slane %v134, 5
  %v138 = vadd.f32 %v100, %v136
  %v139 = vrot.slane %v134, 6
  %v141 = vadd.f32 %v138, %v139
  %v142 = vrot.slane %v134, 7
  %v144 = vadd.f32 %v141, %v142
  %v145 = vrot.slane %v108, 7
  %v147 = vmul.f32 %v100, %v145
  %v149 = vrot.slane %v147, 5
  %v151 = vadd.f32 %v100, %v149
  %v152 = vrot.slane %v147, 6
  %v154 = vadd.f32 %v151, %v152
  %v155 = vrot.slane %v147, 7
  %v157 = vadd.f32 %v154, %v155
  %v158 = vrot.slane %v108, 3
  %v160 = vmul.f32 %v105, %v158
  %v162 = vrot.slane %v160, 5
  %v164 = vadd.f32 %v105, %v162
  %v165 = vrot.slane %v160, 6
  %v167 = vadd.f32 %v164, %v165
  %v168 = vrot.slane %v160, 7
  %v170 = vadd.f32 %v167, %v168
  %v171 = vmul.f32 %v105, %v145
  %v173 = vrot.slane %v171, 5
  %v175 = vadd.f32 %v105, %v173
  %v176 = vrot.slane %v171, 6
  %v178 = vadd.f32 %v175, %v176
  %v179 = vrot.slane %v171, 7
  %v181 = vadd.f32 %v178, %v179
  %v183 = vrot.slane %v119, 3
  %v186 = vrot.slane %v133, 6
  %v189 = vrot.slane %v144, 1
  %v192 = vrot.slane %v157, 4
  %v195 = vrot.slane %v170, 7
  %v198 = vrot.slane %v181, 2
  %vm200 = vcmask 1040384
  %v201 = vsel %vm200, %v183, %v186
  %vm202 = vcmask 1041408
  %v203 = vsel %vm202, %v201, %v189
  %vm204 = vcmask 1042432
  %v205 = vsel %vm204, %v203, %v192
  %vm206 = vcmask 1043456
  %v207 = vsel %vm206, %v205, %v195
  %vm208 = vcmask 1044480
  %v209 = vsel %vm208, %v207, %v198
  %210 = vst [vmem:[%s3] sm:$0x3f] %v209
  // Predicated region
  $region14: #{forward_test.3} parent=0 // pred_check
    _
  $region15: #{forward_test.3} parent=0 // pred_check_branch
    %212 = sbr.rel (0) target = $region17
  $region16: #{forward_test.3} parent=0 // pred_region
    _
  $region17: #{forward_test.3} parent=0 // pred_fallthru
    _
  // Predicated region
  $region18: #{forward_test.3} parent=0 // pred_check
    _
  $region19: #{forward_test.3} parent=0 // pred_check_branch
    %214 = sbr.rel (0) target = $region21
  $region20: #{forward_test.3} parent=0 // pred_region
    _
  $region21: #{forward_test.3} parent=0 // pred_fallthru
    _

</llo_original>
